<compile_context>
chip_gen: v6e
topology: v6e:2x2x1
jax: 0.10.0
libtpu: 0.0.40
codegen_flags: <defaults>
</compile_context>

<pallas_src>
import functools
import math

import jax
import jax.numpy as jnp
from jax import lax
from jax.experimental import pallas as pl
from jax.experimental.pallas import tpu as pltpu


def _tdt_align_kernel(frame_ref, pred_ref, label_ref,
                      sq1_ref, sq2_ref, neg_ref,
                      a1_ref, a2_ref, an_ref, pcar_ref, lcar_ref,
                      *, C, R, tile_rows, ragged, acc_sub):
    """One (Bh, tile_rows, W) tile of the folded sequence for one batch shard.

    frame_ref : (Bh, 1, W)  last input frame (boundary), first C lanes valid
    pred_ref  : (Bh, T, W)  folded predictions, W = k * C
    label_ref : (Bh, T, W)  folded labels
    sq1/sq2/neg: (1, 1, 1)  per-core outputs, written only on the last step
    a1/a2/an  : (acc_sub, W) f32 vector accumulators (VPU adds only per step)
    pcar/lcar : (Bh, 1, W) f32 carried last row (first C lanes = last chunk)
    """
    i = pl.program_id(1)

    @pl.when(i == 0)
    def _init():
        a1_ref[...] = jnp.zeros_like(a1_ref)
        a2_ref[...] = jnp.zeros_like(a2_ref)
        an_ref[...] = jnp.zeros_like(an_ref)
        fr = frame_ref[...].astype(jnp.float32)      # (Bh, 1, W)
        pcar_ref[...] = fr                           # pred0[-1]==label0[-1]==input[:,-1]
        lcar_ref[...] = fr

    pred = pred_ref[...].astype(jnp.float32)         # (Bh, T, W)
    label = label_ref[...].astype(jnp.float32)
    Bh, T, W = pred.shape

    # Previous-time-step tensor via XLU rolls + a first-C-lane fix-up (no full-
    # width concatenation copies through the vld/vst slots).
    #   rolled[b, r, j]  = pred[b, r, j-C]          for j >= C   (within-row shift)
    #   prev  [b, r, :C] = rolled[b, r-1, :C]       (previous row's last chunk)
    if W == C:                       # no lane folding: one row == one time step
        rolled_p, rolled_l = pred, label
    else:
        rolled_p = pltpu.roll(pred, shift=C, axis=2)
        rolled_l = pltpu.roll(label, shift=C, axis=2)
    if T > 1:
        prev_p = pltpu.roll(rolled_p, shift=1, axis=1)
        prev_l = pltpu.roll(rolled_l, shift=1, axis=1)
    else:
        prev_p, prev_l = rolled_p, rolled_l

    row = lax.broadcasted_iota(jnp.int32, (Bh, T, W), 1)
    first_row = row == 0
    # Row 0's "previous row" is the carried row (previous tile / input frame).
    prev_p = jnp.where(first_row, pcar_ref[...], prev_p)
    prev_l = jnp.where(first_row, lcar_ref[...], prev_l)

    if W == C:
        pred_sh, label_sh = prev_p, prev_l
    else:
        lane = lax.broadcasted_iota(jnp.int32, (Bh, T, W), 2)
        in_first_chunk = lane < C
        pred_sh = jnp.where(in_first_chunk, prev_p, rolled_p)
        label_sh = jnp.where(in_first_chunk, prev_l, rolled_l)

    d = pred - label                   # (pred - label), reused for loss1
    p_d = pred - pred_sh               # temporal diff of pred
    l_d = label - label_sh             # temporal diff of label
    dd = p_d - l_d                     # exactly the reference's (p_d - l_d)

    t_sq1 = d * d
    t_sq2 = dd * dd
    t_neg = (p_d * l_d < 0).astype(jnp.float32)

    if ragged:
        # Last tile may extend past the folded length R: mask padded rows
        # (select, so garbage/NaN padding cannot leak into the sums).
        rem = R - i * tile_rows
        valid = row < rem
        t_sq1 = jnp.where(valid, t_sq1, 0.0)
        t_sq2 = jnp.where(valid, t_sq2, 0.0)
        t_neg = jnp.where(valid, t_neg, 0.0)

    # Lane-dense vector accumulation: reduce only the leading axis (vreg adds,
    # no XLU), keep (acc_sub, W) resident in VMEM.
    groups = (Bh * T) // acc_sub
    a1_ref[...] += t_sq1.reshape(groups, acc_sub, W).sum(axis=0)
    a2_ref[...] += t_sq2.reshape(groups, acc_sub, W).sum(axis=0)
    an_ref[...] += t_neg.reshape(groups, acc_sub, W).sum(axis=0)

    # Carry this tile's last row (its first C lanes hold the last time-step chunk).
    pcar_ref[...] = rolled_p[:, T - 1:T, :]
    lcar_ref[...] = rolled_l[:, T - 1:T, :]

    @pl.when(i == pl.num_programs(1) - 1)
    def _final():
        sq1_ref[...] = jnp.sum(a1_ref[...])[None, None, None]
        sq2_ref[...] = jnp.sum(a2_ref[...])[None, None, None]
        neg_ref[...] = jnp.sum(an_ref[...])[None, None, None]


def _fold_factor(L, C):
    """k such that k*C is a multiple of 128 (lane-dense) and k divides L."""
    if C % 128 == 0:
        return 1
    k = 128 // math.gcd(C, 128)        # power of two
    if L % k == 0:
        return k
    return 1


def _vmem_budget():
    """(per-input tile target bytes, vmem_limit_bytes), generation-aware."""
    small = (3 << 20, 48 << 20)        # v7x-class: 64 MiB VMEM per core
    big = (6 << 20, 96 << 20)          # v5e / v6e / v4: 128 MiB VMEM
    cap = None
    try:
        cap = getattr(pltpu.get_tpu_info(), "vmem_capacity_bytes", None)
    except Exception:
        cap = None
    kind = ""
    try:
        kind = jax.devices()[0].device_kind.lower()
    except Exception:
        pass
    if "7" in kind:
        target, limit = small
    elif "v5" in kind or "v6" in kind or (cap is not None and cap >= (120 << 20)):
        target, limit = big
    else:
        target, limit = small
    if cap:
        limit = min(limit, max(cap - (8 << 20), 16 << 20))
    return target, limit


def tdt_align(pred, label, inp, *, tile_rows=None):
    """Pallas implementation of TDTAlign.forward. Returns a scalar f32 loss."""
    B, L, C = pred.shape
    assert label.shape == (B, L, C)
    assert inp.shape[0] == B and inp.shape[-1] == C

    # Lane folding: fold k consecutive time steps into the lane axis (pure reshape).
    k = _fold_factor(L, C)
    W = k * C
    R = L // k

    # 2-TensorCore batch split (parallel leading grid axis); NC=1 when B is odd.
    NC = 2 if (B % 2 == 0 and B >= 2) else 1
    Bh = B // NC

    frame = inp[:, -1:, :]                           # only piece of `inp` used
    if W > C:
        frame = jnp.pad(frame, ((0, 0), (0, 0), (0, W - C)))
    pred_f = pred.reshape(B, R, W) if k > 1 else pred
    label_f = label.reshape(B, R, W) if k > 1 else label

    itemsize = jnp.dtype(pred.dtype).itemsize
    sub = max(8, 32 // itemsize)                     # sublane unit: f32->8, bf16->16, i8->32
    target_bytes, vmem_limit = _vmem_budget()
    bytes_per_row = Bh * W * 4                       # budget with f32 intermediates

    if tile_rows is None:
        tile_rows = max(sub, (target_bytes // bytes_per_row) // sub * sub)
    if tile_rows >= R:
        tile_rows = R                                # single tile; block == full dim is legal
    else:
        assert tile_rows % sub == 0, "tile_rows must be a multiple of the sublane unit"
    n_steps = -(-R // tile_rows)                     # cdiv: ragged tail is masked in-kernel
    ragged = (R % tile_rows) != 0

    bt = Bh * tile_rows
    acc_sub = 8
    while bt % acc_sub:
        acc_sub //= 2

    kernel = functools.partial(_tdt_align_kernel, C=C, R=R, tile_rows=tile_rows,
                               ragged=ragged, acc_sub=acc_sub)
    out3 = jax.ShapeDtypeStruct((NC, 1, 1), jnp.float32)

    sq1, sq2, neg = pl.pallas_call(
        kernel,
        out_shape=(out3, out3, out3),
        grid_spec=pltpu.PrefetchScalarGridSpec(
            num_scalar_prefetch=0,
            grid=(NC, n_steps),
            in_specs=[
                pl.BlockSpec((Bh, 1, W), lambda c, i: (c, 0, 0)),           # last frame
                pl.BlockSpec((Bh, tile_rows, W), lambda c, i: (c, i, 0)),   # pred (folded)
                pl.BlockSpec((Bh, tile_rows, W), lambda c, i: (c, i, 0)),   # label (folded)
            ],
            out_specs=(
                pl.BlockSpec((1, 1, 1), lambda c, i: (c, 0, 0)),
                pl.BlockSpec((1, 1, 1), lambda c, i: (c, 0, 0)),
                pl.BlockSpec((1, 1, 1), lambda c, i: (c, 0, 0)),
            ),
            scratch_shapes=[
                pltpu.VMEM((acc_sub, W), jnp.float32),   # sum (pred-label)^2
                pltpu.VMEM((acc_sub, W), jnp.float32),   # sum (p_d-l_d)^2
                pltpu.VMEM((acc_sub, W), jnp.float32),   # count(p_d*l_d < 0)
                pltpu.VMEM((Bh, 1, W), jnp.float32),     # carried pred row
                pltpu.VMEM((Bh, 1, W), jnp.float32),     # carried label row
            ],
        ),
        compiler_params=pltpu.CompilerParams(
            dimension_semantics=("parallel", "arbitrary"),
            vmem_limit_bytes=vmem_limit,
        ),
    )(frame, pred_f, label_f)

    n = jnp.float32(B * L * C)
    sq1 = jnp.sum(sq1)
    sq2 = jnp.sum(sq2)
    neg = jnp.sum(neg)
    alpha = neg / n                   # fraction of elements with p_d * l_d < 0
    return (sq1 / n) * alpha + (sq2 / n) * (1.0 - alpha)


def _tdt_align_ref(pred, label, inp):
    # Pure-JAX reference mirroring the PyTorch module.
    pred0 = jnp.concatenate([inp[:, -1:, :], pred], axis=1)
    label0 = jnp.concatenate([inp[:, -1:, :], label], axis=1)
    p_d = pred0[:, 1:] - pred0[:, :-1]
    l_d = label0[:, 1:] - label0[:, :-1]
    alpha = jnp.mean((p_d * l_d < 0).astype(jnp.float32))
    loss1 = jnp.mean((pred - label) ** 2)
    loss2 = jnp.mean((p_d - l_d) ** 2)
    return loss1 * alpha + loss2 * (1.0 - alpha)


if __name__ == "__main__":
    key = jax.random.PRNGKey(0)
    kp, kl, ki = jax.random.split(key, 3)

    # Test 1: (B, L, C) = (2, 8, 32) -> lane fold k=4 (W=128), 2-way batch split,
    # single-tile path.
    B, L, C = 2, 8, 32
    pred = jax.random.normal(kp, (B, L, C), dtype=jnp.float32)
    label = jax.random.normal(kl, (B, L, C), dtype=jnp.float32)
    inp = jax.random.normal(ki, (B, 8, C), dtype=jnp.float32)
    out = jax.block_until_ready(tdt_align(pred, label, inp))
    ref = _tdt_align_ref(pred, label, inp)
    assert jnp.allclose(out, ref, rtol=2e-5, atol=1e-5), (out, ref)

    # Test 2: longer sequence, forced tile_rows=8 -> multi-step carried boundary
    # and multi-step vector accumulation.
    B2, L2, C2 = 2, 128, 32
    p2 = jax.random.normal(kp, (B2, L2, C2), dtype=jnp.float32)
    l2 = jax.random.normal(kl, (B2, L2, C2), dtype=jnp.float32)
    i2 = jax.random.normal(ki, (B2, 4, C2), dtype=jnp.float32)
    out2 = jax.block_until_ready(tdt_align(p2, l2, i2, tile_rows=8))
    ref2 = _tdt_align_ref(p2, l2, i2)
    assert jnp.allclose(out2, ref2, rtol=2e-5, atol=1e-5), (out2, ref2)

    # Test 3: odd batch (no core split), C==W (no fold), ragged last tile.
    B3, L3, C3 = 3, 10, 128
    p3 = jax.random.normal(kp, (B3, L3, C3), dtype=jnp.float32)
    l3 = jax.random.normal(kl, (B3, L3, C3), dtype=jnp.float32)
    i3 = jax.random.normal(ki, (B3, 5, C3), dtype=jnp.float32)
    out3 = jax.block_until_ready(tdt_align(p3, l3, i3, tile_rows=8))
    ref3 = _tdt_align_ref(p3, l3, i3)
    assert jnp.allclose(out3, ref3, rtol=2e-5, atol=1e-5), (out3, ref3)

    # Test 4: bf16 inputs (sublane unit 16); kernel widens to f32 per tile.
    B4, L4, C4 = 2, 64, 32
    p4 = jax.random.normal(kp, (B4, L4, C4), dtype=jnp.float32).astype(jnp.bfloat16)
    l4 = jax.random.normal(kl, (B4, L4, C4), dtype=jnp.float32).astype(jnp.bfloat16)
    i4 = jax.random.normal(ki, (B4, 4, C4), dtype=jnp.float32).astype(jnp.bfloat16)
    out4 = jax.block_until_ready(tdt_align(p4, l4, i4))
    ref4 = _tdt_align_ref(p4.astype(jnp.float32), l4.astype(jnp.float32),
                          i4.astype(jnp.float32))
    assert jnp.allclose(out4, ref4, rtol=2e-5, atol=1e-5), (out4, ref4)

    print("KERNEL_OK")
</pallas_src>

<mosaic_0001>
module attributes {stable_mosaic.version = 11 : i64} {
  func.func @_tdt_align_kernel(%arg0: i32, %arg1: i32, %arg2: memref<1x1x128xf32, #tpu.memory_space<vmem>>, %arg3: memref<1x2x128xf32, #tpu.memory_space<vmem>>, %arg4: memref<1x2x128xf32, #tpu.memory_space<vmem>>, %arg5: memref<1x1x1xf32, #tpu.memory_space<vmem>>, %arg6: memref<1x1x1xf32, #tpu.memory_space<vmem>>, %arg7: memref<1x1x1xf32, #tpu.memory_space<vmem>>, %arg8: memref<2x128xf32, #tpu.memory_space<vmem>>, %arg9: memref<2x128xf32, #tpu.memory_space<vmem>>, %arg10: memref<2x128xf32, #tpu.memory_space<vmem>>, %arg11: memref<1x1x128xf32, #tpu.memory_space<vmem>>, %arg12: memref<1x1x128xf32, #tpu.memory_space<vmem>>) attributes {dimension_semantics = [#tpu.dimension_semantics<parallel>, #tpu.dimension_semantics<arbitrary>], iteration_bounds = array<i64: 2, 1>, scalar_prefetch = 0 : i64, scratch_operands = 5 : i64, tpu.core_type = #tpu.core_type<tc>, window_params = [{transform_indices = @transform_0, window_bounds = array<i64: 1, 1, 128>}, {transform_indices = @transform_1, window_bounds = array<i64: 1, 2, 128>}, {transform_indices = @transform_2, window_bounds = array<i64: 1, 2, 128>}, {transform_indices = @transform_3, window_bounds = array<i64: 1, 1, 1>}, {transform_indices = @transform_4, window_bounds = array<i64: 1, 1, 1>}, {transform_indices = @transform_5, window_bounds = array<i64: 1, 1, 1>}]} {
    %c0_i32 = arith.constant 0 : i32
    %0 = arith.cmpi eq, %arg1, %c0_i32 : i32
    %1 = arith.extui %0 : i1 to i32
    %c0_i32_0 = arith.constant 0 : i32
    %2 = arith.cmpi ne, %1, %c0_i32_0 : i32
    scf.if %2 {
      %cst_39 = arith.constant 0.000000e+00 : f32
      %55 = vector.broadcast %cst_39 : f32 to vector<2x128xf32>
      %c0_40 = arith.constant 0 : index
      %c0_41 = arith.constant 0 : index
      %56 = vector.load %arg8[%c0_40, %c0_41] : memref<2x128xf32, #tpu.memory_space<vmem>>, vector<2x128xf32>
      tpu.vector_store %arg8[%c0_40, %c0_41], %55 {strides = array<i32>} : memref<2x128xf32, #tpu.memory_space<vmem>>, vector<2x128xf32>,
      %cst_42 = arith.constant 0.000000e+00 : f32
      %57 = vector.broadcast %cst_42 : f32 to vector<2x128xf32>
      %c0_43 = arith.constant 0 : index
      %c0_44 = arith.constant 0 : index
      %58 = vector.load %arg9[%c0_43, %c0_44] : memref<2x128xf32, #tpu.memory_space<vmem>>, vector<2x128xf32>
      tpu.vector_store %arg9[%c0_43, %c0_44], %57 {strides = array<i32>} : memref<2x128xf32, #tpu.memory_space<vmem>>, vector<2x128xf32>,
      %cst_45 = arith.constant 0.000000e+00 : f32
      %59 = vector.broadcast %cst_45 : f32 to vector<2x128xf32>
      %c0_46 = arith.constant 0 : index
      %c0_47 = arith.constant 0 : index
      %60 = vector.load %arg10[%c0_46, %c0_47] : memref<2x128xf32, #tpu.memory_space<vmem>>, vector<2x128xf32>
      tpu.vector_store %arg10[%c0_46, %c0_47], %59 {strides = array<i32>} : memref<2x128xf32, #tpu.memory_space<vmem>>, vector<2x128xf32>,
      %c0_48 = arith.constant 0 : index
      %c0_49 = arith.constant 0 : index
      %c0_50 = arith.constant 0 : index
      %61 = vector.load %arg2[%c0_48, %c0_49, %c0_50] : memref<1x1x128xf32, #tpu.memory_space<vmem>>, vector<1x1x128xf32>
      %c0_51 = arith.constant 0 : index
      %c0_52 = arith.constant 0 : index
      %c0_53 = arith.constant 0 : index
      %62 = vector.load %arg11[%c0_51, %c0_52, %c0_53] : memref<1x1x128xf32, #tpu.memory_space<vmem>>, vector<1x1x128xf32>
      tpu.vector_store %arg11[%c0_51, %c0_52, %c0_53], %61 {strides = array<i32>} : memref<1x1x128xf32, #tpu.memory_space<vmem>>, vector<1x1x128xf32>,
      %c0_54 = arith.constant 0 : index
      %c0_55 = arith.constant 0 : index
      %c0_56 = arith.constant 0 : index
      %63 = vector.load %arg12[%c0_54, %c0_55, %c0_56] : memref<1x1x128xf32, #tpu.memory_space<vmem>>, vector<1x1x128xf32>
      tpu.vector_store %arg12[%c0_54, %c0_55, %c0_56], %61 {strides = array<i32>} : memref<1x1x128xf32, #tpu.memory_space<vmem>>, vector<1x1x128xf32>,
    } else {
    }
    %c0 = arith.constant 0 : index
    %c0_1 = arith.constant 0 : index
    %c0_2 = arith.constant 0 : index
    %3 = vector.load %arg3[%c0, %c0_1, %c0_2] : memref<1x2x128xf32, #tpu.memory_space<vmem>>, vector<1x2x128xf32>
    %c0_3 = arith.constant 0 : index
    %c0_4 = arith.constant 0 : index
    %c0_5 = arith.constant 0 : index
    %4 = vector.load %arg4[%c0_3, %c0_4, %c0_5] : memref<1x2x128xf32, #tpu.memory_space<vmem>>, vector<1x2x128xf32>
    %c32_i32 = arith.constant 32 : i32
    %5 = tpu.dynamic_rotate %3 by %c32_i32 dim 2 : vector<1x2x128xf32>, i32 -> vector<1x2x128xf32>
    %c32_i32_6 = arith.constant 32 : i32
    %6 = tpu.dynamic_rotate %4 by %c32_i32_6 dim 2 : vector<1x2x128xf32>, i32 -> vector<1x2x128xf32>
    %c1_i32 = arith.constant 1 : i32
    %7 = tpu.dynamic_rotate %5 by %c1_i32 dim 1 : vector<1x2x128xf32>, i32 -> vector<1x2x128xf32>
    %c1_i32_7 = arith.constant 1 : i32
    %8 = tpu.dynamic_rotate %6 by %c1_i32_7 dim 1 : vector<1x2x128xf32>, i32 -> vector<1x2x128xf32>
    %9 = tpu.iota {dimensions = array<i32: 1>} : vector<1x2x128xi32>
    %c0_i32_8 = arith.constant 0 : i32
    %10 = vector.broadcast %c0_i32_8 : i32 to vector<1x2x128xi32>
    %11 = arith.cmpi eq, %9, %10 : vector<1x2x128xi32>
    %c0_9 = arith.constant 0 : index
    %c0_10 = arith.constant 0 : index
    %c0_11 = arith.constant 0 : index
    %12 = vector.load %arg11[%c0_9, %c0_10, %c0_11] : memref<1x1x128xf32, #tpu.memory_space<vmem>>, vector<1x1x128xf32>
    %13 = vector.shape_cast %12 : vector<1x1x128xf32> to vector<1x1x128xf32>
    %14 = vector.broadcast %13 : vector<1x1x128xf32> to vector<1x2x128xf32>
    %15 = arith.select %11, %14, %7 : vector<1x2x128xi1>, vector<1x2x128xf32>
    %c0_12 = arith.constant 0 : index
    %c0_13 = arith.constant 0 : index
    %c0_14 = arith.constant 0 : index
    %16 = vector.load %arg12[%c0_12, %c0_13, %c0_14] : memref<1x1x128xf32, #tpu.memory_space<vmem>>, vector<1x1x128xf32>
    %17 = vector.shape_cast %16 : vector<1x1x128xf32> to vector<1x1x128xf32>
    %18 = vector.broadcast %17 : vector<1x1x128xf32> to vector<1x2x128xf32>
    %19 = arith.select %11, %18, %8 : vector<1x2x128xi1>, vector<1x2x128xf32>
    %20 = tpu.iota {dimensions = array<i32: 2>} : vector<1x2x128xi32>
    %c32_i32_15 = arith.constant 32 : i32
    %21 = vector.broadcast %c32_i32_15 : i32 to vector<1x2x128xi32>
    %22 = arith.cmpi slt, %20, %21 : vector<1x2x128xi32>
    %23 = arith.select %22, %15, %5 : vector<1x2x128xi1>, vector<1x2x128xf32>
    %24 = arith.select %22, %19, %6 : vector<1x2x128xi1>, vector<1x2x128xf32>
    %25 = arith.subf %3, %4 : vector<1x2x128xf32>
    %26 = arith.subf %3, %23 : vector<1x2x128xf32>
    %27 = arith.subf %4, %24 : vector<1x2x128xf32>
    %28 = arith.subf %26, %27 : vector<1x2x128xf32>
    %29 = arith.mulf %25, %25 : vector<1x2x128xf32>
    %30 = arith.mulf %28, %28 : vector<1x2x128xf32>
    %31 = arith.mulf %26, %27 : vector<1x2x128xf32>
    %cst = arith.constant 0.000000e+00 : f32
    %32 = vector.broadcast %cst : f32 to vector<1x2x128xf32>
    %33 = arith.cmpf olt, %31, %32 : vector<1x2x128xf32>
    %34 = arith.extui %33 : vector<1x2x128xi1> to vector<1x2x128xi32>
    %35 = arith.sitofp %34 : vector<1x2x128xi32> to vector<1x2x128xf32>
    %c0_16 = arith.constant 0 : index
    %c0_17 = arith.constant 0 : index
    %36 = vector.load %arg8[%c0_16, %c0_17] : memref<2x128xf32, #tpu.memory_space<vmem>>, vector<2x128xf32>
    %cst_18 = arith.constant dense<0.000000e+00> : vector<2x128xf32>
    %37 = vector.multi_reduction <add>, %29, %cst_18 [0] : vector<1x2x128xf32> to vector<2x128xf32>
    %38 = arith.addf %36, %37 : vector<2x128xf32>
    %c0_19 = arith.constant 0 : index
    %c0_20 = arith.constant 0 : index
    %39 = vector.load %arg8[%c0_19, %c0_20] : memref<2x128xf32, #tpu.memory_space<vmem>>, vector<2x128xf32>
    tpu.vector_store %arg8[%c0_19, %c0_20], %38 {strides = array<i32>} : memref<2x128xf32, #tpu.memory_space<vmem>>, vector<2x128xf32>,
    %c0_21 = arith.constant 0 : index
    %c0_22 = arith.constant 0 : index
    %40 = vector.load %arg9[%c0_21, %c0_22] : memref<2x128xf32, #tpu.memory_space<vmem>>, vector<2x128xf32>
    %cst_23 = arith.constant dense<0.000000e+00> : vector<2x128xf32>
    %41 = vector.multi_reduction <add>, %30, %cst_23 [0] : vector<1x2x128xf32> to vector<2x128xf32>
    %42 = arith.addf %40, %41 : vector<2x128xf32>
    %c0_24 = arith.constant 0 : index
    %c0_25 = arith.constant 0 : index
    %43 = vector.load %arg9[%c0_24, %c0_25] : memref<2x128xf32, #tpu.memory_space<vmem>>, vector<2x128xf32>
    tpu.vector_store %arg9[%c0_24, %c0_25], %42 {strides = array<i32>} : memref<2x128xf32, #tpu.memory_space<vmem>>, vector<2x128xf32>,
    %c0_26 = arith.constant 0 : index
    %c0_27 = arith.constant 0 : index
    %44 = vector.load %arg10[%c0_26, %c0_27] : memref<2x128xf32, #tpu.memory_space<vmem>>, vector<2x128xf32>
    %cst_28 = arith.constant dense<0.000000e+00> : vector<2x128xf32>
    %45 = vector.multi_reduction <add>, %35, %cst_28 [0] : vector<1x2x128xf32> to vector<2x128xf32>
    %46 = arith.addf %44, %45 : vector<2x128xf32>
    %c0_29 = arith.constant 0 : index
    %c0_30 = arith.constant 0 : index
    %47 = vector.load %arg10[%c0_29, %c0_30] : memref<2x128xf32, #tpu.memory_space<vmem>>, vector<2x128xf32>
    tpu.vector_store %arg10[%c0_29, %c0_30], %46 {strides = array<i32>} : memref<2x128xf32, #tpu.memory_space<vmem>>, vector<2x128xf32>,
    %48 = vector.extract_strided_slice %5 {offsets = [0, 1, 0], sizes = [1, 1, 128], strides = [1, 1, 1]} : vector<1x2x128xf32> to vector<1x1x128xf32>
    %c0_31 = arith.constant 0 : index
    %c0_32 = arith.constant 0 : index
    %c0_33 = arith.constant 0 : index
    %49 = vector.load %arg11[%c0_31, %c0_32, %c0_33] : memref<1x1x128xf32, #tpu.memory_space<vmem>>, vector<1x1x128xf32>
    tpu.vector_store %arg11[%c0_31, %c0_32, %c0_33], %48 {strides = array<i32>} : memref<1x1x128xf32, #tpu.memory_space<vmem>>, vector<1x1x128xf32>,
    %50 = vector.extract_strided_slice %6 {offsets = [0, 1, 0], sizes = [1, 1, 128], strides = [1, 1, 1]} : vector<1x2x128xf32> to vector<1x1x128xf32>
    %c0_34 = arith.constant 0 : index
    %c0_35 = arith.constant 0 : index
    %c0_36 = arith.constant 0 : index
    %51 = vector.load %arg12[%c0_34, %c0_35, %c0_36] : memref<1x1x128xf32, #tpu.memory_space<vmem>>, vector<1x1x128xf32>
    tpu.vector_store %arg12[%c0_34, %c0_35, %c0_36], %50 {strides = array<i32>} : memref<1x1x128xf32, #tpu.memory_space<vmem>>, vector<1x1x128xf32>,
    %c0_i32_37 = arith.constant 0 : i32
    %52 = arith.cmpi eq, %arg1, %c0_i32_37 : i32
    %53 = arith.extui %52 : i1 to i32
    %c0_i32_38 = arith.constant 0 : i32
    %54 = arith.cmpi ne, %53, %c0_i32_38 : i32
    scf.if %54 {
      %c0_39 = arith.constant 0 : index
      %c0_40 = arith.constant 0 : index
      %55 = vector.load %arg8[%c0_39, %c0_40] : memref<2x128xf32, #tpu.memory_space<vmem>>, vector<2x128xf32>
      %56 = vector.shape_cast %55 : vector<2x128xf32> to vector<1x2x128xf32>
      %cst_41 = arith.constant dense<0.000000e+00> : vector<1xf32>
      %57 = vector.multi_reduction <add>, %56, %cst_41 [1, 2] : vector<1x2x128xf32> to vector<1xf32>
      %58 = vector.shape_cast %57 : vector<1xf32> to vector<1x1x1xf32>
      %59 = vector.extract %58[0, 0, 0] : f32 from vector<1x1x1xf32>
      %60 = vector.broadcast %59 : f32 to vector<1x1x1xf32>
      %c0_42 = arith.constant 0 : index
      %c0_43 = arith.constant 0 : index
      %c0_44 = arith.constant 0 : index
      %61 = vector.load %arg5[%c0_42, %c0_43, %c0_44] : memref<1x1x1xf32, #tpu.memory_space<vmem>>, vector<1x1x1xf32>
      tpu.vector_store %arg5[%c0_42, %c0_43, %c0_44], %60 {strides = array<i32>} : memref<1x1x1xf32, #tpu.memory_space<vmem>>, vector<1x1x1xf32>,
      %c0_45 = arith.constant 0 : index
      %c0_46 = arith.constant 0 : index
      %62 = vector.load %arg9[%c0_45, %c0_46] : memref<2x128xf32, #tpu.memory_space<vmem>>, vector<2x128xf32>
      %63 = vector.shape_cast %62 : vector<2x128xf32> to vector<1x2x128xf32>
      %cst_47 = arith.constant dense<0.000000e+00> : vector<1xf32>
      %64 = vector.multi_reduction <add>, %63, %cst_47 [1, 2] : vector<1x2x128xf32> to vector<1xf32>
      %65 = vector.shape_cast %64 : vector<1xf32> to vector<1x1x1xf32>
      %66 = vector.extract %65[0, 0, 0] : f32 from vector<1x1x1xf32>
      %67 = vector.broadcast %66 : f32 to vector<1x1x1xf32>
      %c0_48 = arith.constant 0 : index
      %c0_49 = arith.constant 0 : index
      %c0_50 = arith.constant 0 : index
      %68 = vector.load %arg6[%c0_48, %c0_49, %c0_50] : memref<1x1x1xf32, #tpu.memory_space<vmem>>, vector<1x1x1xf32>
      tpu.vector_store %arg6[%c0_48, %c0_49, %c0_50], %67 {strides = array<i32>} : memref<1x1x1xf32, #tpu.memory_space<vmem>>, vector<1x1x1xf32>,
      %c0_51 = arith.constant 0 : index
      %c0_52 = arith.constant 0 : index
      %69 = vector.load %arg10[%c0_51, %c0_52] : memref<2x128xf32, #tpu.memory_space<vmem>>, vector<2x128xf32>
      %70 = vector.shape_cast %69 : vector<2x128xf32> to vector<1x2x128xf32>
      %cst_53 = arith.constant dense<0.000000e+00> : vector<1xf32>
      %71 = vector.multi_reduction <add>, %70, %cst_53 [1, 2] : vector<1x2x128xf32> to vector<1xf32>
      %72 = vector.shape_cast %71 : vector<1xf32> to vector<1x1x1xf32>
      %73 = vector.extract %72[0, 0, 0] : f32 from vector<1x1x1xf32>
      %74 = vector.broadcast %73 : f32 to vector<1x1x1xf32>
      %c0_54 = arith.constant 0 : index
      %c0_55 = arith.constant 0 : index
      %c0_56 = arith.constant 0 : index
      %75 = vector.load %arg7[%c0_54, %c0_55, %c0_56] : memref<1x1x1xf32, #tpu.memory_space<vmem>>, vector<1x1x1xf32>
      tpu.vector_store %arg7[%c0_54, %c0_55, %c0_56], %74 {strides = array<i32>} : memref<1x1x1xf32, #tpu.memory_space<vmem>>, vector<1x1x1xf32>,
    } else {
    }
    return
  }
  func.func @transform_0(%arg0: i32, %arg1: i32) -> (i32, i32, i32) {
    %c0_i32 = arith.constant 0 : i32
    %c0_i32_0 = arith.constant 0 : i32
    %c0_i32_1 = arith.constant 0 : i32
    return %arg0, %c0_i32, %c0_i32_0 : i32, i32, i32
  }
  func.func @transform_1(%arg0: i32, %arg1: i32) -> (i32, i32, i32) {
    %c0_i32 = arith.constant 0 : i32
    %c0_i32_0 = arith.constant 0 : i32
    return %arg0, %arg1, %c0_i32 : i32, i32, i32
  }
  func.func @transform_2(%arg0: i32, %arg1: i32) -> (i32, i32, i32) {
    %c0_i32 = arith.constant 0 : i32
    %c0_i32_0 = arith.constant 0 : i32
    return %arg0, %arg1, %c0_i32 : i32, i32, i32
  }
  func.func @transform_3(%arg0: i32, %arg1: i32) -> (i32, i32, i32) {
    %c0_i32 = arith.constant 0 : i32
    %c0_i32_0 = arith.constant 0 : i32
    %c0_i32_1 = arith.constant 0 : i32
    return %arg0, %c0_i32, %c0_i32_0 : i32, i32, i32
  }
  func.func @transform_4(%arg0: i32, %arg1: i32) -> (i32, i32, i32) {
    %c0_i32 = arith.constant 0 : i32
    %c0_i32_0 = arith.constant 0 : i32
    %c0_i32_1 = arith.constant 0 : i32
    return %arg0, %c0_i32, %c0_i32_0 : i32, i32, i32
  }
  func.func @transform_5(%arg0: i32, %arg1: i32) -> (i32, i32, i32) {
    %c0_i32 = arith.constant 0 : i32
    %c0_i32_0 = arith.constant 0 : i32
    %c0_i32_1 = arith.constant 0 : i32
    return %arg0, %c0_i32, %c0_i32_0 : i32, i32, i32
  }
}

</mosaic_0001>

<llo_original>
// kernel: tpu_custom_call.1
$region0: #{tpu_custom_call.1}
  #allocation0 [shape = 'u32[]', space=smem, size = 0x4, offset = 0x4, fixed_abs, tag = 'smem constant byte address 0x4 - core index']
  #allocation1 [shape = 'u32[144,128]{1,0:T(1,128)}', space=vmem, size = 0x12000, scoped, tag = 'internal scratch']
  #allocation2 [shape = 'f32[2,128]{1,0:T(2,128)}', space=vmem, size = 0x400, scoped, tag = 'scratch operand']
  #allocation3 [shape = 'f32[2,128]{1,0:T(2,128)}', space=vmem, size = 0x400, scoped, tag = 'scratch operand']
  #allocation4 [shape = 'f32[2,128]{1,0:T(2,128)}', space=vmem, size = 0x400, scoped, tag = 'scratch operand']
  #allocation5 [shape = 'f32[1,1,128]{2,1,0:T(1,128)}', space=vmem, size = 0x200, scoped, tag = 'scratch operand']
  #allocation6 [shape = 'f32[1,1,128]{2,1,0:T(1,128)}', space=vmem, size = 0x200, scoped, tag = 'scratch operand']
  %s0 = inlined_call_operand.hbm [shape: f32[2,1,128], index: 0, kind: input, shape index: {}]
  %s1 = inlined_call_operand.hbm [shape: f32[2,2,128], index: 1, kind: input, shape index: {}]
  %s2 = inlined_call_operand.hbm [shape: f32[2,2,128], index: 2, kind: input, shape index: {}]
  %s3 = inlined_call_operand.vmem [shape: f32[2,1,1], index: 3, kind: output, shape index: {0}]
  %s4 = inlined_call_operand.vmem [shape: f32[2,1,1], index: 4, kind: output, shape index: {1}]
  %s5 = inlined_call_operand.vmem [shape: f32[2,1,1], index: 5, kind: output, shape index: {2}]
  %6 = xla_tuple %s3, %s4, %s5
  %s7 = sld [smem:[#allocation0]]
  $region81: #{tpu_custom_call.1} parent=0
    _
  %s9 = ssub.s32 1, %s7
  %s10 = scalar_select 0, %s9, %s7
  $region1: #{tpu_custom_call.1} parent=0
    #allocation7 [shape = 'u8[1024]{0}', space=vmem, size = 0x400, scoped, tag = 'input window, operand 0']
    #allocation8 [shape = 's32[2]{0}', space=sflag, size = 0x8, scoped, tag = 'scoped memory for tpu_custom_call.1']
    #allocation9 [shape = 'u8[2048]{0}', space=vmem, size = 0x800, scoped, tag = 'input window, operand 1']
    #allocation10 [shape = 's32[2]{0}', space=sflag, size = 0x8, scoped, tag = 'scoped memory for tpu_custom_call.1']
    #allocation11 [shape = 'u8[2048]{0}', space=vmem, size = 0x800, scoped, tag = 'input window, operand 2']
    %11 = vsyncpa [#allocation8], 0
    %s12 = scalar_lea.sflag [#allocation8], 1
    %13 = vsyncpa %s12, 0
    %14 = vsyncpa [#allocation10], 0
    %s15 = scalar_lea.sflag [#allocation10], 1
    %16 = vsyncpa %s15, 0
    loop: start=0, step=1, limit=4
    $region2: #{tpu_custom_call.1} parent=1 // loop_pre_header
      _
    $region3: #{tpu_custom_call.1} parent=1 // loop_header
      %s18 = sphi 0, %s22
      %p19 = scmp.ge.s32.totalorder %s18, 4
      %s25 = sphi 0, %s37
      %s26 = sphi 0, %s33
      %s27 = sphi 0, %s25
      %s28 = sphi 0, %s26
      %s29 = sphi 0, %s27
      %s30 = sphi 0, %s28
      %s40 = sphi 0, %s42
      %s43 = sphi 0, %s40
      %s44 = sphi 0, %s43
      %s60 = sphi 0, %s44
      %s68 = sphi 0, %s70
      %s71 = sphi 0, %s68
      %s72 = sphi 0, %s71
      %s88 = sphi 0, %s72
      %s96 = sphi 0, %s98
      %s99 = sphi 0, %s96
      %s100 = sphi 0, %s99
      %s116 = sphi 0, %s100
      %s122 = sphi 0, %s124
      %s125 = sphi 0, %s122
      %s126 = sphi 0, %s125
      %s142 = sphi 0, %s126
      %s148 = sphi 0, %s150
      %s151 = sphi 0, %s148
      %s152 = sphi 0, %s151
      %s168 = sphi 0, %s152
      %s174 = sphi 0, %s176
      %s177 = sphi 0, %s174
      %s178 = sphi 0, %s177
      %s194 = sphi 0, %s178
    $region4: #{tpu_custom_call.1} parent=1 // loop_header_branch
      %21 = sbr.rel (%p19) target = $region8
    $region5: #{tpu_custom_call.1} parent=1 // loop_body
      %s23 = ssub.s32 %s18, 1
      %s24 = ssub.s32 %s18, 2
      %s31 = sadd.s32 1, %s26
      %p32 = scmp.ge.s32.totalorder %s31, 1
      %s33 = scalar_select %p32, 0, %s31
      %s34 = sadd.s32 1, %s25
      %s35 = scalar_select %p32, %s34, %s25
      %p36 = scmp.ge.s32.totalorder %s35, 2
      %s37 = scalar_select %p36, 0, %s35
      %s38 = ssub.s32 %s25, %s37
      %p39 = scmp.eq.s32.totalorder %s38, 0
      %s41 = sadd.s32 %s40, 1
      %s42 = scalar_select %p39, %s40, %s41
      %p45 = pneg %p39
      %p46 = scmp.eq.s32.totalorder %s18, 1
      %p47 = por %p45, %p46
      %p48 = scmp.ne.s32.totalorder %s40, %s43
      %p49 = scmp.eq.s32.totalorder %s18, 0
      %p50 = por %p48, %p49
      %p51 = scmp.ne.s32.totalorder %s40, %s43
      %p52 = scmp.eq.s32.totalorder %s23, 1
      %p53 = por %p51, %p52
      %p54 = scmp.ne.s32.totalorder %s43, %s44
      %p55 = scmp.eq.s32.totalorder %s23, 0
      %p56 = por %p54, %p55
      %p57 = scmp.ne.s32.totalorder %s43, %s44
      %p58 = scmp.eq.s32.totalorder %s24, 1
      %p59 = por %p57, %p58
      %p61 = scmp.ne.s32.totalorder %s44, %s60
      %p62 = scmp.eq.s32.totalorder %s24, 0
      %p63 = por %p61, %p62
      %s64 = ssub.s32 %s25, %s37
      %s65 = ssub.s32 %s26, %s33
      %s66 = sor.u32 %s64, %s65
      %p67 = scmp.eq.s32.totalorder %s66, 0
      %s69 = sadd.s32 %s68, 1
      %s70 = scalar_select %p67, %s68, %s69
      %p73 = pneg %p67
      %p74 = scmp.eq.s32.totalorder %s18, 1
      %p75 = por %p73, %p74
      %p76 = scmp.ne.s32.totalorder %s68, %s71
      %p77 = scmp.eq.s32.totalorder %s18, 0
      %p78 = por %p76, %p77
      %p79 = scmp.ne.s32.totalorder %s68, %s71
      %p80 = scmp.eq.s32.totalorder %s23, 1
      %p81 = por %p79, %p80
      %p82 = scmp.ne.s32.totalorder %s71, %s72
      %p83 = scmp.eq.s32.totalorder %s23, 0
      %p84 = por %p82, %p83
      %p85 = scmp.ne.s32.totalorder %s71, %s72
      %p86 = scmp.eq.s32.totalorder %s24, 1
      %p87 = por %p85, %p86
      %p89 = scmp.ne.s32.totalorder %s72, %s88
      %p90 = scmp.eq.s32.totalorder %s24, 0
      %p91 = por %p89, %p90
      %s92 = ssub.s32 %s25, %s37
      %s93 = ssub.s32 %s26, %s33
      %s94 = sor.u32 %s92, %s93
      %p95 = scmp.eq.s32.totalorder %s94, 0
      %s97 = sadd.s32 %s96, 1
      %s98 = scalar_select %p95, %s96, %s97
      %p101 = pneg %p95
      %p102 = scmp.eq.s32.totalorder %s18, 1
      %p103 = por %p101, %p102
      %p104 = scmp.ne.s32.totalorder %s96, %s99
      %p105 = scmp.eq.s32.totalorder %s18, 0
      %p106 = por %p104, %p105
      %p107 = scmp.ne.s32.totalorder %s96, %s99
      %p108 = scmp.eq.s32.totalorder %s23, 1
      %p109 = por %p107, %p108
      %p110 = scmp.ne.s32.totalorder %s99, %s100
      %p111 = scmp.eq.s32.totalorder %s23, 0
      %p112 = por %p110, %p111
      %p113 = scmp.ne.s32.totalorder %s99, %s100
      %p114 = scmp.eq.s32.totalorder %s24, 1
      %p115 = por %p113, %p114
      %p117 = scmp.ne.s32.totalorder %s100, %s116
      %p118 = scmp.eq.s32.totalorder %s24, 0
      %p119 = por %p117, %p118
      %s120 = ssub.s32 %s25, %s37
      %p121 = scmp.eq.s32.totalorder %s120, 0
      %s123 = sadd.s32 %s122, 1
      %s124 = scalar_select %p121, %s122, %s123
      %p127 = pneg %p121
      %p128 = scmp.eq.s32.totalorder %s18, 1
      %p129 = por %p127, %p128
      %p130 = scmp.ne.s32.totalorder %s122, %s125
      %p131 = scmp.eq.s32.totalorder %s18, 0
      %p132 = por %p130, %p131
      %p133 = scmp.ne.s32.totalorder %s122, %s125
      %p134 = scmp.eq.s32.totalorder %s23, 1
      %p135 = por %p133, %p134
      %p136 = scmp.ne.s32.totalorder %s125, %s126
      %p137 = scmp.eq.s32.totalorder %s23, 0
      %p138 = por %p136, %p137
      %p139 = scmp.ne.s32.totalorder %s125, %s126
      %p140 = scmp.eq.s32.totalorder %s24, 1
      %p141 = por %p139, %p140
      %p143 = scmp.ne.s32.totalorder %s126, %s142
      %p144 = scmp.eq.s32.totalorder %s24, 0
      %p145 = por %p143, %p144
      %s146 = ssub.s32 %s25, %s37
      %p147 = scmp.eq.s32.totalorder %s146, 0
      %s149 = sadd.s32 %s148, 1
      %s150 = scalar_select %p147, %s148, %s149
      %p153 = pneg %p147
      %p154 = scmp.eq.s32.totalorder %s18, 1
      %p155 = por %p153, %p154
      %p156 = scmp.ne.s32.totalorder %s148, %s151
      %p157 = scmp.eq.s32.totalorder %s18, 0
      %p158 = por %p156, %p157
      %p159 = scmp.ne.s32.totalorder %s148, %s151
      %p160 = scmp.eq.s32.totalorder %s23, 1
      %p161 = por %p159, %p160
      %p162 = scmp.ne.s32.totalorder %s151, %s152
      %p163 = scmp.eq.s32.totalorder %s23, 0
      %p164 = por %p162, %p163
      %p165 = scmp.ne.s32.totalorder %s151, %s152
      %p166 = scmp.eq.s32.totalorder %s24, 1
      %p167 = por %p165, %p166
      %p169 = scmp.ne.s32.totalorder %s152, %s168
      %p170 = scmp.eq.s32.totalorder %s24, 0
      %p171 = por %p169, %p170
      %s172 = ssub.s32 %s25, %s37
      %p173 = scmp.eq.s32.totalorder %s172, 0
      %s175 = sadd.s32 %s174, 1
      %s176 = scalar_select %p173, %s174, %s175
      %p179 = pneg %p173
      %p180 = scmp.eq.s32.totalorder %s18, 1
      %p181 = por %p179, %p180
      %p182 = scmp.ne.s32.totalorder %s174, %s177
      %p183 = scmp.eq.s32.totalorder %s18, 0
      %p184 = por %p182, %p183
      %p185 = scmp.ne.s32.totalorder %s174, %s177
      %p186 = scmp.eq.s32.totalorder %s23, 1
      %p187 = por %p185, %p186
      %p188 = scmp.ne.s32.totalorder %s177, %s178
      %p189 = scmp.eq.s32.totalorder %s23, 0
      %p190 = por %p188, %p189
      %p191 = scmp.ne.s32.totalorder %s177, %s178
      %p192 = scmp.eq.s32.totalorder %s24, 1
      %p193 = por %p191, %p192
      %p195 = scmp.ne.s32.totalorder %s178, %s194
      %p196 = scmp.eq.s32.totalorder %s24, 0
      %p197 = por %p195, %p196
      %p198 = scmp.le.s32.totalorder 1, %s18
      %p199 = scmp.lt.s32.totalorder %s18, 3
      %p200 = pnand %p198, %p199
      %p201 = pneg %p200
      // Predicated region
      $region9: #{tpu_custom_call.1} parent=5 // pred_check
        _
      $region10: #{tpu_custom_call.1} parent=5 // pred_check_branch
        %203 = sbr.rel (%p200) target = $region12
      $region11: #{tpu_custom_call.1} parent=5 // pred_region
        %s204 = ssub.s32 %s18, 1
      $region12: #{tpu_custom_call.1} parent=5 // pred_fallthru
        _
      %p205 = scmp.lt.s32.totalorder %s18, 2
      // Predicated region
      $region13: #{tpu_custom_call.1} parent=5 // pred_check
        %p206 = pneg %p205
      $region14: #{tpu_custom_call.1} parent=5 // pred_check_branch
        %208 = sbr.rel (%p206) target = $region16
      $region15: #{tpu_custom_call.1} parent=5 // pred_region
        // Predicated region
        $region17: #{tpu_custom_call.1} parent=15 // pred_check
          %p209 = pneg %p50
        $region18: #{tpu_custom_call.1} parent=15 // pred_check_branch
          %211 = sbr.rel (%p209) target = $region20
        $region19: #{tpu_custom_call.1} parent=15 // pred_region
          %s212 = sand.u32 %s40, 1
          %s213 = scalar_lea.sflag [#allocation8], %s212
          %s214 = sand.u32 %s40, 1
          %s215 = scalar_lea.vmem [#allocation7], %s214
          %s217 = ssub.s32 16, 16
          %218 = vsyncadd %s213, %s217
          %s219 = smul.addr %s25, 16
          %s220 = scalar_lea.hbm %s0, %s219
          %s222 = sshll.u32 %s215, 4
          %s223 = int_to_ptr.vmem [resolvable:$true] %s222
          %225 = dma.hbm_to_vmem [thread:$0]  %s220, 16, %s223, %s213
        $region20: #{tpu_custom_call.1} parent=15 // pred_fallthru
          _
        // Predicated region
        $region21: #{tpu_custom_call.1} parent=15 // pred_check
          %p226 = pneg %p78
        $region22: #{tpu_custom_call.1} parent=15 // pred_check_branch
          %228 = sbr.rel (%p226) target = $region24
        $region23: #{tpu_custom_call.1} parent=15 // pred_region
          %s229 = sand.u32 %s18, 1
          %s230 = scalar_lea.sflag [#allocation10], %s229
          %s231 = sand.u32 %s68, 1
          %s232 = smul.addr %s231, 2
          %s233 = scalar_lea.vmem [#allocation9], %s232
          %s235 = ssub.s32 32, 32
          %236 = vsyncadd %s230, %s235
          %s237 = sadd.s32 %s26, %s25
          %s238 = smul.addr %s237, 32
          %s239 = scalar_lea.hbm %s1, %s238
          %s241 = sshll.u32 %s233, 4
          %s242 = int_to_ptr.vmem [resolvable:$true] %s241
          %244 = dma.hbm_to_vmem [thread:$0]  %s239, 32, %s242, %s230
        $region24: #{tpu_custom_call.1} parent=15 // pred_fallthru
          _
        // Predicated region
        $region25: #{tpu_custom_call.1} parent=15 // pred_check
          %p245 = pneg %p106
        $region26: #{tpu_custom_call.1} parent=15 // pred_check_branch
          %247 = sbr.rel (%p245) target = $region28
        $region27: #{tpu_custom_call.1} parent=15 // pred_region
          %s248 = sand.u32 %s18, 1
          %s249 = scalar_lea.sflag [#allocation10], %s248
          %s250 = sand.u32 %s96, 1
          %s251 = smul.addr %s250, 2
          %s252 = scalar_lea.vmem [#allocation11], %s251
          %s254 = ssub.s32 32, 32
          %255 = vsyncadd %s249, %s254
          %s256 = sadd.s32 %s26, %s25
          %s257 = smul.addr %s256, 32
          %s258 = scalar_lea.hbm %s2, %s257
          %s260 = sshll.u32 %s252, 4
          %s261 = int_to_ptr.vmem [resolvable:$true] %s260
          %263 = dma.hbm_to_vmem [thread:$0]  %s258, 32, %s261, %s249
        $region28: #{tpu_custom_call.1} parent=15 // pred_fallthru
          _
      $region16: #{tpu_custom_call.1} parent=5 // pred_fallthru
        _
      %p264 = scmp.le.s32.totalorder 1, %s18
      %p265 = scmp.lt.s32.totalorder %s18, 3
      %p266 = pnand %p264, %p265
      %p267 = pneg %p266
      // Predicated region
      $region29: #{tpu_custom_call.1} parent=5 // pred_check
        _
      $region30: #{tpu_custom_call.1} parent=5 // pred_check_branch
        %269 = sbr.rel (%p266) target = $region32
      $region31: #{tpu_custom_call.1} parent=5 // pred_region
        %s270 = ssub.s32 %s18, 1
        %s271 = sand.u32 %s43, 1
        %s272 = scalar_lea.sflag [#allocation8], %s271
        %s273 = sand.u32 %s43, 1
        %s274 = scalar_lea.vmem [#allocation7], %s273
        // Predicated region
        $region33: #{tpu_custom_call.1} parent=31 // pred_check
          %p275 = pneg %p56
        $region34: #{tpu_custom_call.1} parent=31 // pred_check_branch
          %277 = sbr.rel (%p275) target = $region36
        $region35: #{tpu_custom_call.1} parent=31 // pred_region
          %278 = dma.done %s272, 16
        $region36: #{tpu_custom_call.1} parent=31 // pred_fallthru
          _
        %s279 = sand.u32 %s23, 1
        %s280 = scalar_lea.sflag [#allocation10], %s279
        %s281 = sand.u32 %s71, 1
        %s282 = smul.addr %s281, 2
        %s283 = scalar_lea.vmem [#allocation9], %s282
        // Predicated region
        $region37: #{tpu_custom_call.1} parent=31 // pred_check
          %p284 = pneg %p84
        $region38: #{tpu_custom_call.1} parent=31 // pred_check_branch
          %286 = sbr.rel (%p284) target = $region40
        $region39: #{tpu_custom_call.1} parent=31 // pred_region
          %287 = dma.done %s280, 32
        $region40: #{tpu_custom_call.1} parent=31 // pred_fallthru
          _
        %s288 = sand.u32 %s23, 1
        %s289 = scalar_lea.sflag [#allocation10], %s288
        %s290 = sand.u32 %s99, 1
        %s291 = smul.addr %s290, 2
        %s292 = scalar_lea.vmem [#allocation11], %s291
        // Predicated region
        $region41: #{tpu_custom_call.1} parent=31 // pred_check
          %p293 = pneg %p112
        $region42: #{tpu_custom_call.1} parent=31 // pred_check_branch
          %295 = sbr.rel (%p293) target = $region44
        $region43: #{tpu_custom_call.1} parent=31 // pred_region
          %296 = dma.done %s289, 32
        $region44: #{tpu_custom_call.1} parent=31 // pred_fallthru
          _
        %s297 = sand.u32 %s43, 1
        %s298 = scalar_lea.sflag [#allocation8], %s297
        %s299 = sand.u32 %s43, 1
        %s300 = scalar_lea.vmem [#allocation7], %s299
        %p301 = pneg %p56
        %p302 = pneg %p53
        %s303 = sand.u32 %s23, 1
        %s304 = scalar_lea.sflag [#allocation10], %s303
        %s305 = sand.u32 %s71, 1
        %s306 = smul.addr %s305, 2
        %s307 = scalar_lea.vmem [#allocation9], %s306
        %p308 = pneg %p84
        %p309 = pneg %p81
        %s310 = sand.u32 %s23, 1
        %s311 = scalar_lea.sflag [#allocation10], %s310
        %s312 = sand.u32 %s99, 1
        %s313 = smul.addr %s312, 2
        %s314 = scalar_lea.vmem [#allocation11], %s313
        %p315 = pneg %p112
        %p316 = pneg %p109
        %p317 = pneg %p138
        %p318 = pneg %p135
        %p319 = scmp.lt.s32.totalorder %s27, 1
        %s320 = scalar_select %p319, %s27, 1
        %s321 = scalar_lea.vmem %s3, %s320
        %p322 = pneg %p164
        %p323 = pneg %p161
        %p324 = scmp.lt.s32.totalorder %s27, 1
        %s325 = scalar_select %p324, %s27, 1
        %s326 = scalar_lea.vmem %s4, %s325
        %p327 = pneg %p190
        %p328 = pneg %p187
        %p329 = scmp.lt.s32.totalorder %s27, 1
        %s330 = scalar_select %p329, %s27, 1
        %s331 = scalar_lea.vmem %s5, %s330
        %p332 = scmp.lt.s32.totalorder %s27, 1
        %s333 = scalar_select %p332, %s27, 1
        %s334 = scalar_lea.vmem %s3, %s333
        %p335 = scmp.lt.s32.totalorder %s27, 1
        %s336 = scalar_select %p335, %s27, 1
        %s337 = scalar_lea.vmem %s4, %s336
        %p338 = scmp.lt.s32.totalorder %s27, 1
        %s339 = scalar_select %p338, %s27, 1
        %s340 = scalar_lea.vmem %s5, %s339
        %p341 = scmp.eq.s32.totalorder %s28, 0
        // Predicated region
        $region45: #{tpu_custom_call.1} parent=31 // pred_check
          %p342 = pneg %p341
        $region46: #{tpu_custom_call.1} parent=31 // pred_check_branch
          %344 = sbr.rel (%p342) target = $region48
        $region47: #{tpu_custom_call.1} parent=31 // pred_region
          %345 = vst [vmem:[#allocation2] sm:$0x3] 0.0
          %346 = vst [vmem:[#allocation3] sm:$0x3] 0.0
          %347 = vst [vmem:[#allocation4] sm:$0x3] 0.0
          %v348 = vld [vmem:[%s274] sm:$0x1]
          %349 = vst [vmem:[#allocation5] sm:$0x1] %v348
          %350 = vst [vmem:[#allocation6] sm:$0x1] %v348
        $region48: #{tpu_custom_call.1} parent=31 // pred_fallthru
          _
        %v351 = vld [vmem:[%s283] sm:$0x3]
        %v352 = vld [vmem:[%s292] sm:$0x3]
        %353 = vrot.lane.b32.xlu0 %v351, 32
        %v354 = vpop.permute.xlu0 %353
        %355 = vrot.lane.b32.xlu0 %v352, 32
        %v356 = vpop.permute.xlu0 %355
        %vm357 = vcmask 1047554
        %v358 = vrot.slane %v354, 6
        %v359 = vsel %vm357, %v358, %v354
        %v360 = vrot.slane %v359, 6
        %v361 = vsel %vm357, %v360, %v354
        %v362 = vrot.slane %v356, 6
        %v363 = vsel %vm357, %v362, %v356
        %v364 = vrot.slane %v363, 6
        %v365 = vsel %vm357, %v364, %v356
        %v366 = vlaneseq
        %v367 = vshrl.u32 %v366, 7
        %vm368 = vcmp.eq.s32.totalorder %v367, 0
        %v369 = vld [vmem:[#allocation5] sm:$0x1]
        %v371 = vlaneseq
        %v372 = vshrl.u32 %v371, 7
        %v373 = vsub.s32 0, %v372
        %v374 = vrot.slane %v369, %v373
        %v377 = vrot.slane %v361, 1
        %v379 = vsel %vm368, %v374, %v377
        %v380 = vld [vmem:[#allocation6] sm:$0x1]
        %v382 = vlaneseq
        %v383 = vshrl.u32 %v382, 7
        %v384 = vsub.s32 0, %v383
        %v385 = vrot.slane %v380, %v384
        %v388 = vrot.slane %v365, 1
        %v390 = vsel %vm368, %v385, %v388
        %v391 = vlaneseq
        %v392 = vand.u32 %v391, 127
        %vm393 = vcmp.lt.s32.totalorder %v392, 32
        %v394 = vsel %vm393, %v379, %v354
        %v395 = vsel %vm393, %v390, %v356
        %v396 = vsub.f32 %v351, %v352
        %v397 = vsub.f32 %v351, %v394
        %v398 = vsub.f32 %v352, %v395
        %v399 = vsub.f32 %v397, %v398
        %v400 = vmul.f32 %v396, %v396
        %v401 = vmul.f32 %v399, %v399
        %v402 = vmul.f32 %v397, %v398
        %vm403 = vcmp.lt.f32.partialorder %v402, 0.0
        %v404 = vsel %vm403, 1, 0
        %v405 = vcvt.s32.f32 %v404
        %v406 = vld [vmem:[#allocation2] sm:$0x3]
        %v407 = vadd.f32 %v400, 0.0
        %v408 = vadd.f32 %v406, %v407
        %409 = vst [vmem:[#allocation2] sm:$0x3] %v408
        %v410 = vld [vmem:[#allocation3] sm:$0x3]
        %v411 = vadd.f32 %v401, 0.0
        %v412 = vadd.f32 %v410, %v411
        %413 = vst [vmem:[#allocation3] sm:$0x3] %v412
        %v414 = vld [vmem:[#allocation4] sm:$0x3]
        %v415 = vadd.f32 %v405, 0.0
        %v416 = vadd.f32 %v414, %v415
        %417 = vst [vmem:[#allocation4] sm:$0x3] %v416
        %418 = vst [vmem:[#allocation5 - $0x1] sm:$0x2] %v354
        %419 = vst [vmem:[#allocation6 - $0x1] sm:$0x2] %v356
        // Predicated region
        $region49: #{tpu_custom_call.1} parent=31 // pred_check
          %p420 = pneg %p341
        $region50: #{tpu_custom_call.1} parent=31 // pred_check_branch
          %422 = sbr.rel (%p420) target = $region52
        $region51: #{tpu_custom_call.1} parent=31 // pred_region
          %v423 = vld [vmem:[#allocation2] sm:$0x3]
          %vm424 = vcmask 1041408
          %v425 = vsel %vm424, %v423, 0.0
          %426 = vadd.xlane.f32.xlu0 %v425
          %v427 = vpop.xlane.xlu0 %426
          %v428 = vrot.slane %v427, 4
          %v429 = vadd.f32 %v427, %v428
          %v430 = vrot.slane %v429, 2
          %v431 = vadd.f32 %v429, %v430
          %v432 = vrot.slane %v431, 1
          %v433 = vadd.f32 %v431, %v432
          %s434 = vtos %v433
          %v435 = vstv %s434
          %vm436 = vcmask 0
          %437 = vst.msk [vmem:[%s334] sm:$0x1] %vm436, %v435
          %v438 = vld [vmem:[#allocation3] sm:$0x3]
          %v439 = vsel %vm424, %v438, 0.0
          %440 = vadd.xlane.f32.xlu0 %v439
          %v441 = vpop.xlane.xlu0 %440
          %v442 = vrot.slane %v441, 4
          %v443 = vadd.f32 %v441, %v442
          %v444 = vrot.slane %v443, 2
          %v445 = vadd.f32 %v443, %v444
          %v446 = vrot.slane %v445, 1
          %v447 = vadd.f32 %v445, %v446
          %s448 = vtos %v447
          %v449 = vstv %s448
          %450 = vst.msk [vmem:[%s337] sm:$0x1] %vm436, %v449
          %v451 = vld [vmem:[#allocation4] sm:$0x3]
          %v452 = vsel %vm424, %v451, 0.0
          %453 = vadd.xlane.f32.xlu0 %v452
          %v454 = vpop.xlane.xlu0 %453
          %v455 = vrot.slane %v454, 4
          %v456 = vadd.f32 %v454, %v455
          %v457 = vrot.slane %v456, 2
          %v458 = vadd.f32 %v456, %v457
          %v459 = vrot.slane %v458, 1
          %v460 = vadd.f32 %v458, %v459
          %s461 = vtos %v460
          %v462 = vstv %s461
          %463 = vst.msk [vmem:[%s340] sm:$0x1] %vm436, %v462
        $region52: #{tpu_custom_call.1} parent=31 // pred_fallthru
          _
        %p464 = scmp.lt.s32.totalorder %s27, 1
        %s465 = scalar_select %p464, %s27, 1
        %s466 = scalar_lea.vmem %s3, %s465
        %p467 = scmp.lt.s32.totalorder %s27, 1
        %s468 = scalar_select %p467, %s27, 1
        %s469 = scalar_lea.vmem %s4, %s468
        %p470 = scmp.lt.s32.totalorder %s27, 1
        %s471 = scalar_select %p470, %s27, 1
        %s472 = scalar_lea.vmem %s5, %s471
        // Predicated region
        $region53: #{tpu_custom_call.1} parent=31 // pred_check
          %p473 = pneg %p135
        $region54: #{tpu_custom_call.1} parent=31 // pred_check_branch
          %475 = sbr.rel (%p473) target = $region56
        $region55: #{tpu_custom_call.1} parent=31 // pred_region
          _
        $region56: #{tpu_custom_call.1} parent=31 // pred_fallthru
          _
        // Predicated region
        $region57: #{tpu_custom_call.1} parent=31 // pred_check
          %p476 = pneg %p161
        $region58: #{tpu_custom_call.1} parent=31 // pred_check_branch
          %478 = sbr.rel (%p476) target = $region60
        $region59: #{tpu_custom_call.1} parent=31 // pred_region
          _
        $region60: #{tpu_custom_call.1} parent=31 // pred_fallthru
          _
        // Predicated region
        $region61: #{tpu_custom_call.1} parent=31 // pred_check
          %p479 = pneg %p187
        $region62: #{tpu_custom_call.1} parent=31 // pred_check_branch
          %481 = sbr.rel (%p479) target = $region64
        $region63: #{tpu_custom_call.1} parent=31 // pred_region
          _
        $region64: #{tpu_custom_call.1} parent=31 // pred_fallthru
          _
      $region32: #{tpu_custom_call.1} parent=5 // pred_fallthru
        _
      %p482 = scmp.le.s32.totalorder 2, %s18
      // Predicated region
      $region65: #{tpu_custom_call.1} parent=5 // pred_check
        %p483 = pneg %p482
      $region66: #{tpu_custom_call.1} parent=5 // pred_check_branch
        %485 = sbr.rel (%p483) target = $region68
      $region67: #{tpu_custom_call.1} parent=5 // pred_region
        %s486 = ssub.s32 %s18, 2
        // Predicated region
        $region69: #{tpu_custom_call.1} parent=67 // pred_check
          %p487 = pneg %p141
        $region70: #{tpu_custom_call.1} parent=67 // pred_check_branch
          %489 = sbr.rel (%p487) target = $region72
        $region71: #{tpu_custom_call.1} parent=67 // pred_region
          %p490 = scmp.lt.s32.totalorder %s29, 1
          %s491 = scalar_select %p490, %s29, 1
          %s492 = scalar_lea.vmem %s3, %s491
        $region72: #{tpu_custom_call.1} parent=67 // pred_fallthru
          _
        // Predicated region
        $region73: #{tpu_custom_call.1} parent=67 // pred_check
          %p493 = pneg %p167
        $region74: #{tpu_custom_call.1} parent=67 // pred_check_branch
          %495 = sbr.rel (%p493) target = $region76
        $region75: #{tpu_custom_call.1} parent=67 // pred_region
          %p496 = scmp.lt.s32.totalorder %s29, 1
          %s497 = scalar_select %p496, %s29, 1
          %s498 = scalar_lea.vmem %s4, %s497
        $region76: #{tpu_custom_call.1} parent=67 // pred_fallthru
          _
        // Predicated region
        $region77: #{tpu_custom_call.1} parent=67 // pred_check
          %p499 = pneg %p193
        $region78: #{tpu_custom_call.1} parent=67 // pred_check_branch
          %501 = sbr.rel (%p499) target = $region80
        $region79: #{tpu_custom_call.1} parent=67 // pred_region
          %p502 = scmp.lt.s32.totalorder %s29, 1
          %s503 = scalar_select %p502, %s29, 1
          %s504 = scalar_lea.vmem %s5, %s503
        $region80: #{tpu_custom_call.1} parent=67 // pred_fallthru
          _
      $region68: #{tpu_custom_call.1} parent=5 // pred_fallthru
        _
    $region6: #{tpu_custom_call.1} parent=1 // loop_footer
      %s22 = sadd.s32 1, %s18
    $region7: #{tpu_custom_call.1} parent=1 // loop_footer_branch
      %17 = sbr.rel target = $region3
    $region8: #{tpu_custom_call.1} parent=1 // loop_exit
      _
    %505 = vsyncpa [#allocation8], 1
    %s506 = scalar_lea.sflag [#allocation8], 1
    %507 = vsyncpa %s506, 1
    %508 = vsyncpa [#allocation10], 1
    %s509 = scalar_lea.sflag [#allocation10], 1
    %510 = vsyncpa %s509, 1

</llo_original>
